<compile_context>
chip_gen: v7x
topology: tpu7x:2x2x1
jax: 0.10.0
libtpu: 0.0.40
codegen_flags: <defaults>
</compile_context>

<pallas_src>
import functools

import jax
import jax.numpy as jnp
from jax.experimental import pallas as pl
from jax.experimental.pallas import tpu as pltpu


# -----------------------------------------------------------------------------
# Fused kernel: patch-embedding matmul + LayerNormChannel + position embedding.
# Each grid step handles one (row_tile, F) slab of tokens (batch folded in).
# -----------------------------------------------------------------------------
def _embeddings_kernel(x_ref, w_ref, prm_ref, pos_ref, o_ref, *, eps):
    # Patch embedding on the MXU: bf16 inputs, f32 accumulator.
    y = jnp.dot(x_ref[...], w_ref[...], preferred_element_type=jnp.float32)

    prm = prm_ref[...]                         # (8, hidden) f32, rows 0..2 used
    y = y + prm[0:1, :]                        # conv bias

    # LayerNormChannel: normalize over the channel (last / lane) dim, f32 math.
    u = jnp.mean(y, axis=-1, keepdims=True)
    d = y - u
    s = jnp.mean(d * d, axis=-1, keepdims=True)
    yn = d * jax.lax.rsqrt(s + eps)            # EUP rsqrt, no divide
    yn = yn * prm[1:2, :] + prm[2:3, :]

    # Position-embedding add, then single cast to the (bf16) output dtype.
    o_ref[...] = (yn + pos_ref[...].astype(jnp.float32)).astype(o_ref.dtype)


def _choose_row_tile(total_rows, F, hidden, *, target_rows=2048,
                     tile_vmem_budget=20 * 1024 * 1024):
    """Pick a token-row tile: large enough to amortize per-step overhead,
    small enough for VMEM (conservative budget works on v5e/v6e/v7x)."""
    in_b, out_b, par_b = 2, 2, 4               # bf16 in / bf16 out / f32 params
    # Double-buffered x, pos and out tiles scale with rows; weight+params fixed.
    per_row = 2 * (F * in_b + hidden * in_b + hidden * out_b)
    fixed = 2 * (F * hidden * in_b + 8 * hidden * par_b)
    budget_rows = max(8, (tile_vmem_budget - fixed) // max(per_row, 1))
    rt = min(total_rows, target_rows, budget_rows)
    rt = max(8, (int(rt) // 8) * 8)
    # If a single tile would cover everything, split it so the "parallel" grid
    # axis has >= 2 steps and both v7x TensorCores get work.
    if rt >= total_rows and rt >= 16:
        half = (((total_rows + 1) // 2) + 7) // 8 * 8
        rt = min(rt, max(8, half))
    return rt


def embeddings_forward(x, conv_w, conv_b, ln_w, ln_b, pos,
                       *, patch_size, row_tile=None, eps=1e-6,
                       out_dtype=jnp.bfloat16):
    """Forward pass of the Embeddings module.

    x:       (B, Cin, D, H, W)
    conv_w:  (hidden, Cin, pd, ph, pw)   Conv3d weight (kernel == stride == patch)
    conv_b:  (hidden,)
    ln_w/b:  (hidden,)                   LayerNormChannel affine params
    pos:     (1, N, hidden)              position embeddings
    returns: (B, N, hidden) in out_dtype
    """
    B, Cin, D, Hh, W = x.shape
    pd, ph, pw = patch_size
    assert D % pd == 0 and Hh % ph == 0 and W % pw == 0
    Dp, Hp, Wp = D // pd, Hh // ph, W // pw
    N = Dp * Hp * Wp
    F = Cin * pd * ph * pw
    hidden = conv_w.shape[0]
    R = B * N

    # --- layout glue: patchify NCDHW -> (B*N, F), bf16 -------------------------
    # Token order n = (d'*Hp + h')*Wp + w'  (matches flatten(2)); feature order
    # (cin, kd, kh, kw) matches the row-major flatten of the conv weight.
    # TODO(synk): for large inputs, fuse this transpose into the kernel's input
    # DMA (allow_input_fusion / Element-indexed BlockSpec over NCDHW) to avoid
    # one extra HBM round trip of x.
    xp = x.astype(jnp.bfloat16).reshape(B, Cin, Dp, pd, Hp, ph, Wp, pw)
    xp = xp.transpose(0, 2, 4, 6, 1, 3, 5, 7)            # (B,Dp,Hp,Wp,Cin,pd,ph,pw)
    x_tok = xp.reshape(R, F)

    w_mat = conv_w.reshape(hidden, F).T.astype(jnp.bfloat16)       # (F, hidden)

    # Pack conv bias / LN weight / LN bias into one (8, hidden) f32 block.
    params = jnp.zeros((8, hidden), jnp.float32)
    params = params.at[0].set(conv_b.astype(jnp.float32))
    params = params.at[1].set(ln_w.astype(jnp.float32))
    params = params.at[2].set(ln_b.astype(jnp.float32))

    # Pre-broadcast pos to the folded (B*N, hidden) row layout (tiny, bf16).
    pos_b = jnp.broadcast_to(pos.reshape(N, hidden).astype(jnp.bfloat16),
                             (B, N, hidden)).reshape(R, hidden)

    # --- row tiling over the folded token axis ---------------------------------
    if row_tile is None:
        row_tile = _choose_row_tile(R, F, hidden)
    row_tile = max(8, (int(row_tile) // 8) * 8)
    steps = pl.cdiv(R, row_tile)
    R_pad = steps * row_tile
    if R_pad != R:
        padr = R_pad - R
        x_tok = jnp.pad(x_tok, ((0, padr), (0, 0)))
        pos_b = jnp.pad(pos_b, ((0, padr), (0, 0)))

    out = pl.pallas_call(
        functools.partial(_embeddings_kernel, eps=eps),
        out_shape=jax.ShapeDtypeStruct((R_pad, hidden), out_dtype),
        grid=(steps,),
        in_specs=[
            pl.BlockSpec((row_tile, F), lambda i: (i, 0)),       # token features
            pl.BlockSpec((F, hidden), lambda i: (0, 0)),         # conv weight (resident)
            pl.BlockSpec((8, hidden), lambda i: (0, 0)),         # packed bias/LN params
            pl.BlockSpec((row_tile, hidden), lambda i: (i, 0)),  # pos embeddings
        ],
        out_specs=pl.BlockSpec((row_tile, hidden), lambda i: (i, 0)),
        compiler_params=pltpu.CompilerParams(
            dimension_semantics=("parallel",),
            vmem_limit_bytes=32 * 1024 * 1024),
    )(x_tok, w_mat, params, pos_b)

    return out[:R].reshape(B, N, hidden)


# -----------------------------------------------------------------------------
# Pure-JAX reference mirroring the PyTorch module (for correctness check).
# -----------------------------------------------------------------------------
def embeddings_reference(x, conv_w, conv_b, ln_w, ln_b, pos, *, patch_size,
                         eps=1e-6):
    pd, ph, pw = patch_size
    y = jax.lax.conv_general_dilated(
        x, conv_w, window_strides=(pd, ph, pw), padding="VALID",
        dimension_numbers=("NCDHW", "OIDHW", "NCDHW"),
        precision=jax.lax.Precision.HIGHEST)
    y = y + conv_b.reshape(1, -1, 1, 1, 1)
    u = jnp.mean(y, axis=1, keepdims=True)
    s = jnp.mean((y - u) ** 2, axis=1, keepdims=True)
    y = (y - u) / jnp.sqrt(s + eps)
    y = ln_w.reshape(1, -1, 1, 1, 1) * y + ln_b.reshape(1, -1, 1, 1, 1)
    B, C = y.shape[:2]
    y = y.reshape(B, C, -1).transpose(0, 2, 1)            # (B, N, hidden)
    return y + pos


if __name__ == "__main__":
    # Small shapes consistent with the module: batch=2, in_channels=4,
    # img_size=(8,8,8), patch_size=(2,2,2) -> 64 patches, hidden=128
    # (hidden chosen lane-dense so stores are full 128-lane vsts).
    B, Cin = 2, 4
    D, Hh, W = 8, 8, 8
    patch = (2, 2, 2)
    hidden = 128
    N = (D // patch[0]) * (Hh // patch[1]) * (W // patch[2])

    key = jax.random.PRNGKey(0)
    kx, kw, kb, kpos = jax.random.split(key, 4)
    x = jax.random.normal(kx, (B, Cin, D, Hh, W), jnp.float32)
    conv_w = 0.05 * jax.random.normal(kw, (hidden, Cin) + patch, jnp.float32)
    conv_b = 0.05 * jax.random.normal(kb, (hidden,), jnp.float32)
    ln_w = jnp.ones((hidden,), jnp.float32)
    ln_b = jnp.zeros((hidden,), jnp.float32)
    # Module inits pos embeddings to zeros; use random values for a real test.
    pos = 0.02 * jax.random.normal(kpos, (1, N, hidden), jnp.float32)

    out = embeddings_forward(x, conv_w, conv_b, ln_w, ln_b, pos,
                             patch_size=patch)
    jax.block_until_ready(out)

    assert out.shape == (B, N, hidden)
    out_f32 = out.astype(jnp.float32)
    assert bool(jnp.all(jnp.isfinite(out_f32)))

    # Reference on bf16-rounded inputs (same rounding the kernel applies), f32
    # math — isolates kernel correctness from input-cast error.
    x_r = x.astype(jnp.bfloat16).astype(jnp.float32)
    w_r = conv_w.astype(jnp.bfloat16).astype(jnp.float32)
    pos_r = pos.astype(jnp.bfloat16).astype(jnp.float32)
    ref = embeddings_reference(x_r, w_r, conv_b, ln_w, ln_b, pos_r,
                               patch_size=patch)
    rel_err = float(jnp.max(jnp.abs(out_f32 - ref)) /
                    (jnp.max(jnp.abs(ref)) + 1e-6))
    assert rel_err < 2e-2, f"mismatch vs reference: rel_err={rel_err}"

    print("KERNEL_OK")
</pallas_src>

<mosaic_0001>
module attributes {stable_mosaic.version = 11 : i64} {
  func.func @_embeddings_kernel(%arg0: i32, %arg1: memref<64x32xbf16, #tpu.memory_space<vmem>>, %arg2: memref<32x128xbf16, #tpu.memory_space<vmem>>, %arg3: memref<8x128xf32, #tpu.memory_space<vmem>>, %arg4: memref<64x128xbf16, #tpu.memory_space<vmem>>, %arg5: memref<64x128xbf16, #tpu.memory_space<vmem>>) attributes {dimension_semantics = [#tpu.dimension_semantics<parallel>], iteration_bounds = array<i64: 2>, scalar_prefetch = 0 : i64, scratch_operands = 0 : i64, tpu.core_type = #tpu.core_type<tc>, window_params = [{transform_indices = @transform_0, window_bounds = array<i64: 64, 32>}, {pipeline_mode = #tpu.pipeline_mode<synchronous>, transform_indices = @transform_1, window_bounds = array<i64: 32, 128>}, {pipeline_mode = #tpu.pipeline_mode<synchronous>, transform_indices = @transform_2, window_bounds = array<i64: 8, 128>}, {transform_indices = @transform_3, window_bounds = array<i64: 64, 128>}, {transform_indices = @transform_4, window_bounds = array<i64: 64, 128>}]} {
    %c0 = arith.constant 0 : index
    %c0_0 = arith.constant 0 : index
    %0 = vector.load %arg1[%c0, %c0_0] : memref<64x32xbf16, #tpu.memory_space<vmem>>, vector<64x32xbf16>
    %c0_1 = arith.constant 0 : index
    %c0_2 = arith.constant 0 : index
    %1 = vector.load %arg2[%c0_1, %c0_2] : memref<32x128xbf16, #tpu.memory_space<vmem>>, vector<32x128xbf16>
    %cst = arith.constant dense<0.000000e+00> : vector<64x128xf32>
    %2 = tpu.matmul %0, %1, %cst {dimension_numbers = #tpu.dot_dimension_numbers<[1], [0], [0], [1], [0, 0, 1, 1], [], []>} : vector<64x32xbf16>, vector<32x128xbf16>, vector<64x128xf32> -> vector<64x128xf32>
    %c0_3 = arith.constant 0 : index
    %c0_4 = arith.constant 0 : index
    %3 = vector.load %arg3[%c0_3, %c0_4] : memref<8x128xf32, #tpu.memory_space<vmem>>, vector<8x128xf32>
    %4 = vector.extract_strided_slice %3 {offsets = [0, 0], sizes = [1, 128], strides = [1, 1]} : vector<8x128xf32> to vector<1x128xf32>
    %5 = vector.broadcast %4 : vector<1x128xf32> to vector<64x128xf32>
    %6 = arith.addf %2, %5 : vector<64x128xf32>
    %cst_5 = arith.constant dense<0.000000e+00> : vector<64xf32>
    %7 = vector.multi_reduction <add>, %6, %cst_5 [1] : vector<64x128xf32> to vector<64xf32>
    %8 = vector.shape_cast %7 : vector<64xf32> to vector<64x1xf32>
    %cst_6 = arith.constant 1.280000e+02 : f32
    %9 = vector.broadcast %cst_6 : f32 to vector<64x1xf32>
    %10 = arith.divf %8, %9 : vector<64x1xf32>
    %11 = vector.broadcast %10 : vector<64x1xf32> to vector<64x128xf32>
    %12 = arith.subf %6, %11 : vector<64x128xf32>
    %13 = arith.mulf %12, %12 : vector<64x128xf32>
    %cst_7 = arith.constant dense<0.000000e+00> : vector<64xf32>
    %14 = vector.multi_reduction <add>, %13, %cst_7 [1] : vector<64x128xf32> to vector<64xf32>
    %15 = vector.shape_cast %14 : vector<64xf32> to vector<64x1xf32>
    %cst_8 = arith.constant 1.280000e+02 : f32
    %16 = vector.broadcast %cst_8 : f32 to vector<64x1xf32>
    %17 = arith.divf %15, %16 : vector<64x1xf32>
    %cst_9 = arith.constant 9.99999997E-7 : f32
    %18 = vector.broadcast %cst_9 : f32 to vector<64x1xf32>
    %19 = arith.addf %17, %18 : vector<64x1xf32>
    %20 = math.rsqrt %19 : vector<64x1xf32>
    %21 = vector.broadcast %20 : vector<64x1xf32> to vector<64x128xf32>
    %22 = arith.mulf %12, %21 : vector<64x128xf32>
    %23 = vector.extract_strided_slice %3 {offsets = [1, 0], sizes = [1, 128], strides = [1, 1]} : vector<8x128xf32> to vector<1x128xf32>
    %24 = vector.broadcast %23 : vector<1x128xf32> to vector<64x128xf32>
    %25 = arith.mulf %22, %24 : vector<64x128xf32>
    %26 = vector.extract_strided_slice %3 {offsets = [2, 0], sizes = [1, 128], strides = [1, 1]} : vector<8x128xf32> to vector<1x128xf32>
    %27 = vector.broadcast %26 : vector<1x128xf32> to vector<64x128xf32>
    %28 = arith.addf %25, %27 : vector<64x128xf32>
    %c0_10 = arith.constant 0 : index
    %c0_11 = arith.constant 0 : index
    %29 = vector.load %arg4[%c0_10, %c0_11] : memref<64x128xbf16, #tpu.memory_space<vmem>>, vector<64x128xbf16>
    %30 = arith.extf %29 : vector<64x128xbf16> to vector<64x128xf32>
    %31 = arith.addf %28, %30 : vector<64x128xf32>
    %32 = arith.truncf %31 : vector<64x128xf32> to vector<64x128xbf16>
    %c0_12 = arith.constant 0 : index
    %c0_13 = arith.constant 0 : index
    %33 = vector.load %arg5[%c0_12, %c0_13] : memref<64x128xbf16, #tpu.memory_space<vmem>>, vector<64x128xbf16>
    tpu.vector_store %arg5[%c0_12, %c0_13], %32 {strides = array<i32>} : memref<64x128xbf16, #tpu.memory_space<vmem>>, vector<64x128xbf16>,
    return
  }
  func.func @transform_0(%arg0: i32) -> (i32, i32) {
    %c0_i32 = arith.constant 0 : i32
    %c0_i32_0 = arith.constant 0 : i32
    return %arg0, %c0_i32 : i32, i32
  }
  func.func @transform_1(%arg0: i32) -> (i32, i32) {
    %c0_i32 = arith.constant 0 : i32
    %c0_i32_0 = arith.constant 0 : i32
    %c0_i32_1 = arith.constant 0 : i32
    return %c0_i32, %c0_i32_0 : i32, i32
  }
  func.func @transform_2(%arg0: i32) -> (i32, i32) {
    %c0_i32 = arith.constant 0 : i32
    %c0_i32_0 = arith.constant 0 : i32
    %c0_i32_1 = arith.constant 0 : i32
    return %c0_i32, %c0_i32_0 : i32, i32
  }
  func.func @transform_3(%arg0: i32) -> (i32, i32) {
    %c0_i32 = arith.constant 0 : i32
    %c0_i32_0 = arith.constant 0 : i32
    return %arg0, %c0_i32 : i32, i32
  }
  func.func @transform_4(%arg0: i32) -> (i32, i32) {
    %c0_i32 = arith.constant 0 : i32
    %c0_i32_0 = arith.constant 0 : i32
    return %arg0, %c0_i32 : i32, i32
  }
}

</mosaic_0001>

<llo_original>
// kernel: tpu_custom_call.1
$region0: #{tpu_custom_call.1}
  #allocation0 [shape = 'u32[]', space=smem, size = 0x4, offset = 0x4, fixed_abs, tag = 'smem constant byte address 0x4 - core index']
  #allocation1 [shape = 'u32[144,128]{1,0:T(1,128)}', space=vmem, size = 0x12000, scoped, tag = 'internal scratch']
  %s0 = inlined_call_operand.vmem [shape: bf16[128,32], index: 0, kind: input, shape index: {}]
  %s1 = inlined_call_operand.vmem [shape: bf16[32,128], index: 1, kind: input, shape index: {}]
  %s2 = inlined_call_operand.vmem [shape: f32[8,128], index: 2, kind: input, shape index: {}]
  %s3 = inlined_call_operand.vmem [shape: bf16[128,128], index: 3, kind: input, shape index: {}]
  %s4 = inlined_call_operand.hbm [shape: bf16[128,128], index: 4, kind: output, shape index: {}]
  %s5 = sld [smem:[#allocation0]]
  $region49: #{tpu_custom_call.1} parent=0
    _
  %s7 = ssub.s32 1, %s5
  %s8 = scalar_select 0, %s7, %s5
  $region1: #{tpu_custom_call.1} parent=0
    #allocation2 [shape = 'u8[32768]{0}', space=vmem, size = 0x8000, scoped, tag = 'output window, operand 0']
    #allocation3 [shape = 's32[2]{0}', space=sflag, size = 0x8, scoped, tag = 'scoped memory for tpu_custom_call.1']
    %9 = vsyncpa [#allocation3], 0
    %s10 = scalar_lea.sflag [#allocation3], 1
    %11 = vsyncpa %s10, 0
    loop: start=0, step=1, limit=4
    $region2: #{tpu_custom_call.1} parent=1 // loop_pre_header
      _
    $region3: #{tpu_custom_call.1} parent=1 // loop_header
      %s13 = sphi 0, %s17
      %p14 = scmp.ge.s32.totalorder %s13, 4
      %s23 = sphi 0, %s25
      %s26 = sphi 0, %s23
      %s27 = sphi 0, %s26
      %s43 = sphi 0, %s27
      %s47 = sphi 0, %s47
      %s49 = sphi 0, %s47
      %s50 = sphi 0, %s49
      %s64 = sphi 0, %s50
      %s68 = sphi 0, %s68
      %s70 = sphi 0, %s68
      %s71 = sphi 0, %s70
      %s85 = sphi 0, %s71
      %s91 = sphi 0, %s93
      %s94 = sphi 0, %s91
      %s95 = sphi 0, %s94
      %s111 = sphi 0, %s95
      %s117 = sphi 0, %s119
      %s120 = sphi 0, %s117
      %s121 = sphi 0, %s120
      %s137 = sphi 0, %s121
    $region4: #{tpu_custom_call.1} parent=1 // loop_header_branch
      %16 = sbr.rel (%p14) target = $region8
    $region5: #{tpu_custom_call.1} parent=1 // loop_body
      %s18 = ssub.s32 %s13, 1
      %s19 = ssub.s32 %s13, 2
      %s20 = sadd.s32 %s13, 1
      %s21 = ssub.s32 %s13, %s20
      %p22 = scmp.eq.s32.totalorder %s21, 0
      %s24 = sadd.s32 %s23, 1
      %s25 = scalar_select %p22, %s23, %s24
      %p28 = pneg %p22
      %p29 = scmp.eq.s32.totalorder %s13, 1
      %p30 = por %p28, %p29
      %p31 = scmp.ne.s32.totalorder %s23, %s26
      %p32 = scmp.eq.s32.totalorder %s13, 0
      %p33 = por %p31, %p32
      %p34 = scmp.ne.s32.totalorder %s23, %s26
      %p35 = scmp.eq.s32.totalorder %s18, 1
      %p36 = por %p34, %p35
      %p37 = scmp.ne.s32.totalorder %s26, %s27
      %p38 = scmp.eq.s32.totalorder %s18, 0
      %p39 = por %p37, %p38
      %p40 = scmp.ne.s32.totalorder %s26, %s27
      %p41 = scmp.eq.s32.totalorder %s19, 1
      %p42 = por %p40, %p41
      %p44 = scmp.ne.s32.totalorder %s27, %s43
      %p45 = scmp.eq.s32.totalorder %s19, 0
      %p46 = por %p44, %p45
      %s48 = sadd.s32 %s47, 1
      %p51 = scmp.eq.s32.totalorder %s13, 1
      %p52 = scmp.ne.s32.totalorder %s47, %s49
      %p53 = scmp.eq.s32.totalorder %s13, 0
      %p54 = por %p52, %p53
      %p55 = scmp.ne.s32.totalorder %s47, %s49
      %p56 = scmp.eq.s32.totalorder %s18, 1
      %p57 = por %p55, %p56
      %p58 = scmp.ne.s32.totalorder %s49, %s50
      %p59 = scmp.eq.s32.totalorder %s18, 0
      %p60 = por %p58, %p59
      %p61 = scmp.ne.s32.totalorder %s49, %s50
      %p62 = scmp.eq.s32.totalorder %s19, 1
      %p63 = por %p61, %p62
      %p65 = scmp.ne.s32.totalorder %s50, %s64
      %p66 = scmp.eq.s32.totalorder %s19, 0
      %p67 = por %p65, %p66
      %s69 = sadd.s32 %s68, 1
      %p72 = scmp.eq.s32.totalorder %s13, 1
      %p73 = scmp.ne.s32.totalorder %s68, %s70
      %p74 = scmp.eq.s32.totalorder %s13, 0
      %p75 = por %p73, %p74
      %p76 = scmp.ne.s32.totalorder %s68, %s70
      %p77 = scmp.eq.s32.totalorder %s18, 1
      %p78 = por %p76, %p77
      %p79 = scmp.ne.s32.totalorder %s70, %s71
      %p80 = scmp.eq.s32.totalorder %s18, 0
      %p81 = por %p79, %p80
      %p82 = scmp.ne.s32.totalorder %s70, %s71
      %p83 = scmp.eq.s32.totalorder %s19, 1
      %p84 = por %p82, %p83
      %p86 = scmp.ne.s32.totalorder %s71, %s85
      %p87 = scmp.eq.s32.totalorder %s19, 0
      %p88 = por %p86, %p87
      %s89 = ssub.s32 %s13, %s20
      %p90 = scmp.eq.s32.totalorder %s89, 0
      %s92 = sadd.s32 %s91, 1
      %s93 = scalar_select %p90, %s91, %s92
      %p96 = pneg %p90
      %p97 = scmp.eq.s32.totalorder %s13, 1
      %p98 = por %p96, %p97
      %p99 = scmp.ne.s32.totalorder %s91, %s94
      %p100 = scmp.eq.s32.totalorder %s13, 0
      %p101 = por %p99, %p100
      %p102 = scmp.ne.s32.totalorder %s91, %s94
      %p103 = scmp.eq.s32.totalorder %s18, 1
      %p104 = por %p102, %p103
      %p105 = scmp.ne.s32.totalorder %s94, %s95
      %p106 = scmp.eq.s32.totalorder %s18, 0
      %p107 = por %p105, %p106
      %p108 = scmp.ne.s32.totalorder %s94, %s95
      %p109 = scmp.eq.s32.totalorder %s19, 1
      %p110 = por %p108, %p109
      %p112 = scmp.ne.s32.totalorder %s95, %s111
      %p113 = scmp.eq.s32.totalorder %s19, 0
      %p114 = por %p112, %p113
      %s115 = ssub.s32 %s13, %s20
      %p116 = scmp.eq.s32.totalorder %s115, 0
      %s118 = sadd.s32 %s117, 1
      %s119 = scalar_select %p116, %s117, %s118
      %p122 = pneg %p116
      %p123 = scmp.eq.s32.totalorder %s13, 1
      %p124 = por %p122, %p123
      %p125 = scmp.ne.s32.totalorder %s117, %s120
      %p126 = scmp.eq.s32.totalorder %s13, 0
      %p127 = por %p125, %p126
      %p128 = scmp.ne.s32.totalorder %s117, %s120
      %p129 = scmp.eq.s32.totalorder %s18, 1
      %p130 = por %p128, %p129
      %p131 = scmp.ne.s32.totalorder %s120, %s121
      %p132 = scmp.eq.s32.totalorder %s18, 0
      %p133 = por %p131, %p132
      %p134 = scmp.ne.s32.totalorder %s120, %s121
      %p135 = scmp.eq.s32.totalorder %s19, 1
      %p136 = por %p134, %p135
      %p138 = scmp.ne.s32.totalorder %s121, %s137
      %p139 = scmp.eq.s32.totalorder %s19, 0
      %p140 = por %p138, %p139
      %p141 = scmp.le.s32.totalorder 1, %s13
      %p142 = scmp.lt.s32.totalorder %s13, 3
      %p143 = pnand %p141, %p142
      %p144 = pneg %p143
      // Predicated region
      $region9: #{tpu_custom_call.1} parent=5 // pred_check
        _
      $region10: #{tpu_custom_call.1} parent=5 // pred_check_branch
        %146 = sbr.rel (%p143) target = $region12
      $region11: #{tpu_custom_call.1} parent=5 // pred_region
        %s147 = ssub.s32 %s13, 1
        // Predicated region
        $region13: #{tpu_custom_call.1} parent=11 // pred_check
          %p148 = pneg %p60
        $region14: #{tpu_custom_call.1} parent=11 // pred_check_branch
          %150 = sbr.rel (%p148) target = $region16
        $region15: #{tpu_custom_call.1} parent=11 // pred_region
          _
        $region16: #{tpu_custom_call.1} parent=11 // pred_fallthru
          _
        // Predicated region
        $region17: #{tpu_custom_call.1} parent=11 // pred_check
          %p151 = pneg %p81
        $region18: #{tpu_custom_call.1} parent=11 // pred_check_branch
          %153 = sbr.rel (%p151) target = $region20
        $region19: #{tpu_custom_call.1} parent=11 // pred_region
          _
        $region20: #{tpu_custom_call.1} parent=11 // pred_fallthru
          _
      $region12: #{tpu_custom_call.1} parent=5 // pred_fallthru
        _
      %p154 = scmp.lt.s32.totalorder %s13, 2
      // Predicated region
      $region21: #{tpu_custom_call.1} parent=5 // pred_check
        %p155 = pneg %p154
      $region22: #{tpu_custom_call.1} parent=5 // pred_check_branch
        %157 = sbr.rel (%p155) target = $region24
      $region23: #{tpu_custom_call.1} parent=5 // pred_region
        // Predicated region
        $region25: #{tpu_custom_call.1} parent=23 // pred_check
          %p158 = pneg %p33
        $region26: #{tpu_custom_call.1} parent=23 // pred_check_branch
          %160 = sbr.rel (%p158) target = $region28
        $region27: #{tpu_custom_call.1} parent=23 // pred_region
          %s161 = smul.u32 8, %s13
          %p162 = scmp.lt.s32.totalorder %s161, 15
          %s163 = scalar_select %p162, %s161, 15
          %s164 = smul.addr %s163, 4
          %s165 = scalar_lea.vmem %s0, %s164
          %s166 = smul.u32 8, %s13
        $region28: #{tpu_custom_call.1} parent=23 // pred_fallthru
          _
        // Predicated region
        $region29: #{tpu_custom_call.1} parent=23 // pred_check
          %p167 = pneg %p101
        $region30: #{tpu_custom_call.1} parent=23 // pred_check_branch
          %169 = sbr.rel (%p167) target = $region32
        $region31: #{tpu_custom_call.1} parent=23 // pred_region
          %s170 = smul.u32 8, %s13
          %p171 = scmp.lt.s32.totalorder %s170, 15
          %s172 = scalar_select %p171, %s170, 15
          %s173 = smul.addr %s172, 4
          %s174 = scalar_lea.vmem %s3, %s173
          %s175 = smul.u32 8, %s13
        $region32: #{tpu_custom_call.1} parent=23 // pred_fallthru
          _
      $region24: #{tpu_custom_call.1} parent=5 // pred_fallthru
        _
      %p176 = scmp.le.s32.totalorder 1, %s13
      %p177 = scmp.lt.s32.totalorder %s13, 3
      %p178 = pnand %p176, %p177
      %p179 = pneg %p178
      // Predicated region
      $region33: #{tpu_custom_call.1} parent=5 // pred_check
        _
      $region34: #{tpu_custom_call.1} parent=5 // pred_check_branch
        %181 = sbr.rel (%p178) target = $region36
      $region35: #{tpu_custom_call.1} parent=5 // pred_region
        %s182 = ssub.s32 %s13, 1
        %s183 = smul.u32 8, %s18
        %p184 = scmp.lt.s32.totalorder %s183, 15
        %s185 = scalar_select %p184, %s183, 15
        %s186 = smul.addr %s185, 4
        %s187 = scalar_lea.vmem %s0, %s186
        %p188 = pneg %p39
        %p189 = pneg %p36
        %p190 = pneg %p60
        %p191 = pneg %p57
        %p192 = pneg %p81
        %p193 = pneg %p78
        %s194 = smul.u32 8, %s18
        %p195 = scmp.lt.s32.totalorder %s194, 15
        %s196 = scalar_select %p195, %s194, 15
        %s197 = smul.addr %s196, 4
        %s198 = scalar_lea.vmem %s3, %s197
        %p199 = pneg %p107
        %p200 = pneg %p104
        %p201 = pneg %p133
        %p202 = pneg %p130
        %s203 = sand.u32 %s120, 1
        %s204 = scalar_lea.sflag [#allocation3], %s203
        %s205 = sand.u32 %s120, 1
        %s206 = smul.addr %s205, 32
        %s207 = scalar_lea.vmem [#allocation2], %s206
        %s208 = smul.u32 8, %s18
        %p209 = scmp.lt.s32.totalorder %s208, 15
        %s210 = scalar_select %p209, %s208, 15
        %s211 = smul.addr %s210, 4
        %s212 = scalar_lea.vmem %s0, %s211
        %s213 = smul.u32 8, %s18
        %s214 = smul.u32 8, %s18
        %p215 = scmp.lt.s32.totalorder %s214, 15
        %s216 = scalar_select %p215, %s214, 15
        %s217 = smul.addr %s216, 4
        %s218 = scalar_lea.vmem %s3, %s217
        %s219 = smul.u32 8, %s18
        %s220 = smul.u32 8, %s18
        %v222 = vld [vmem:[%s212] sm:$0xf]
        %v223 = vld [vmem:[%s212 + $0x4] sm:$0xf]
        %v224 = vld [vmem:[%s212 + $0x8] sm:$0xf]
        %v225 = vld [vmem:[%s212 + $0xc] sm:$0xf]
        %v226 = vld [vmem:[%s212 + $0x10] sm:$0xf]
        %v227 = vld [vmem:[%s212 + $0x14] sm:$0xf]
        %v228 = vld [vmem:[%s212 + $0x18] sm:$0xf]
        %v229 = vld [vmem:[%s212 + $0x1c] sm:$0xf]
        %v230 = vld [vmem:[%s1] sm:$0xf]
        %v231 = vld [vmem:[%s1 + $0x4] sm:$0xf]
        %v232 = vld [vmem:[%s1 + $0x8] sm:$0xf]
        %v233 = vld [vmem:[%s1 + $0xc] sm:$0xf]
        %v234 = vld [vmem:[%s2] sm:$0xff]
        %v235 = vlaneseq
        %v236 = vshrl.u32 %v235, 7
        %v237 = vsub.s32 0, %v236
        %v238 = vrot.slane %v234, %v237
        %v247 = vunpack.c.l.b16 %v222
        %v248 = vunpack.c.l.b16 %v223
        %v249 = vunpack.c.l.b16 %v224
        %v250 = vunpack.c.l.b16 %v225
        %v251 = vunpack.c.l.b16 %v226
        %v252 = vunpack.c.l.b16 %v227
        %v253 = vunpack.c.l.b16 %v228
        %v254 = vunpack.c.l.b16 %v229
        %v255 = vpack.c.b16 %v248, %v247
        %v256 = vpack.c.b16 %v250, %v249
        %v257 = vpack.c.b16 %v252, %v251
        %v258 = vpack.c.b16 %v254, %v253
        %v263 = vunpack.c.l.b16 %v230
        %v264 = vunpack.c.l.b16 %v231
        %v265 = vunpack.c.l.b16 %v232
        %v266 = vunpack.c.l.b16 %v233
        %v267 = vpack.c.b16 %v264, %v263
        %v268 = vpack.c.b16 %v266, %v265
        %vm271 = vcmask 261120
        %v273 = vsel %vm271, %v255, 0
        %v276 = vsel %vm271, %v256, 0
        %v279 = vsel %vm271, %v257, 0
        %v282 = vsel %vm271, %v258, 0
        %284 = vmatprep.subr.bf16.mxu0 0
        %285 = vmatpush1.bf16.msra.mxu0 %v267
        %286 = vmatprep.subr.bf16.mxu0 0
        %287 = vmatpush1.bf16.msra.mxu0 %v268
        %288 = vmatprep.subr.bf16.mxu0 0
        %289 = vmatpush1.bf16.msra.mxu0 0
        %290 = vmatprep.subr.bf16.mxu0 0
        %291 = vmatpush1.bf16.msra.mxu0 0
        %292 = vmatprep.subr.bf16.mxu0 0
        %293 = vmatpush1.bf16.msra.mxu0 0
        %294 = vmatprep.subr.bf16.mxu0 0
        %295 = vmatpush1.bf16.msra.mxu0 0
        %296 = vmatprep.subr.bf16.mxu0 0
        %297 = vmatpush1.bf16.msra.mxu0 0
        %298 = vmatprep.subr.bf16.mxu0 0
        %299 = vmatpush1.bf16.msra.mxu0 0
        %300 = vmatprep.subr.bf16.mxu0 0
        %301 = vmatpush1.bf16.msra.mxu0 0
        %302 = vmatprep.subr.bf16.mxu0 0
        %303 = vmatpush1.bf16.msra.mxu0 0
        %304 = vmatprep.subr.bf16.mxu0 0
        %305 = vmatpush1.bf16.msra.mxu0 0
        %306 = vmatprep.subr.bf16.mxu0 0
        %307 = vmatpush1.bf16.msra.mxu0 0
        %308 = vmatprep.subr.bf16.mxu0 0
        %309 = vmatpush1.bf16.msra.mxu0 0
        %310 = vmatprep.subr.bf16.mxu0 0
        %311 = vmatpush1.bf16.msra.mxu0 0
        %312 = vmatprep.subr.bf16.mxu0 0
        %313 = vmatpush1.bf16.msra.mxu0 0
        %314 = vmatprep.subr.bf16.mxu0 0
        %315 = vmatpush1.bf16.msra.mxu0 0
        %316 = vmatprep.mubr.bf16.mxu0 0
        %317 = vmatmul.mubr.bf16.gmra.mrb[0].mxu0 %v273
        %v318 = vpop.f32.mrb[0].mxu0
        %v319 = vadd.f32 %v238, %v318
        %v320 = vpop.f32.mrb[0].mxu0
        %v321 = vpop.f32.mrb[0].mxu0
        %v322 = vadd.f32 %v238, %v321
        %v323 = vpop.f32.mrb[0].mxu0
        %324 = vmatprep.mubr.bf16.mxu0 0
        %325 = vmatmul.mubr.bf16.gmra.mrb[0].mxu0 %v276
        %v326 = vpop.f32.mrb[0].mxu0
        %v327 = vadd.f32 %v238, %v326
        %v328 = vpop.f32.mrb[0].mxu0
        %v329 = vpop.f32.mrb[0].mxu0
        %v330 = vadd.f32 %v238, %v329
        %v331 = vpop.f32.mrb[0].mxu0
        %332 = vmatprep.mubr.bf16.mxu0 0
        %333 = vmatmul.mubr.bf16.gmra.mrb[0].mxu0 %v279
        %v334 = vpop.f32.mrb[0].mxu0
        %v335 = vadd.f32 %v238, %v334
        %v336 = vpop.f32.mrb[0].mxu0
        %v337 = vpop.f32.mrb[0].mxu0
        %v338 = vadd.f32 %v238, %v337
        %v339 = vpop.f32.mrb[0].mxu0
        %340 = vmatprep.mubr.bf16.mxu0 0
        %341 = vmatmul.mubr.bf16.gmra.mrb[0].mxu0 %v282
        %v342 = vpop.f32.mrb[0].mxu0
        %v343 = vadd.f32 %v238, %v342
        %v344 = vpop.f32.mrb[0].mxu0
        %v345 = vpop.f32.mrb[0].mxu0
        %v346 = vadd.f32 %v238, %v345
        %v347 = vpop.f32.mrb[0].mxu0
        %348 = vdwg.mxu0
        %349 = vadd.xlane.f32.xlu0 %v319
        %v350 = vpop.xlane.xlu0 %349
        %351 = vadd.xlane.f32.xlu0 %v322
        %v352 = vpop.xlane.xlu0 %351
        %353 = vadd.xlane.f32.xlu0 %v327
        %v354 = vpop.xlane.xlu0 %353
        %355 = vadd.xlane.f32.xlu0 %v330
        %v356 = vpop.xlane.xlu0 %355
        %357 = vadd.xlane.f32.xlu0 %v335
        %v358 = vpop.xlane.xlu0 %357
        %359 = vadd.xlane.f32.xlu0 %v338
        %v360 = vpop.xlane.xlu0 %359
        %361 = vadd.xlane.f32.xlu0 %v343
        %v362 = vpop.xlane.xlu0 %361
        %363 = vadd.xlane.f32.xlu0 %v346
        %v364 = vpop.xlane.xlu0 %363
        %v365 = vrcp.pop 128.0
        %v366 = vmul.f32 %v350, %v365
        %v367 = vmul.f32 %v352, %v365
        %v368 = vmul.f32 %v354, %v365
        %v369 = vmul.f32 %v356, %v365
        %v370 = vmul.f32 %v358, %v365
        %v371 = vmul.f32 %v360, %v365
        %v372 = vmul.f32 %v362, %v365
        %v373 = vmul.f32 %v364, %v365
        %v374 = vsub.f32 %v319, %v366
        %v375 = vsub.f32 %v322, %v367
        %v376 = vsub.f32 %v327, %v368
        %v377 = vsub.f32 %v330, %v369
        %v378 = vsub.f32 %v335, %v370
        %v379 = vsub.f32 %v338, %v371
        %v380 = vsub.f32 %v343, %v372
        %v381 = vsub.f32 %v346, %v373
        %v382 = vmul.f32 %v374, %v374
        %v383 = vmul.f32 %v375, %v375
        %v384 = vmul.f32 %v376, %v376
        %v385 = vmul.f32 %v377, %v377
        %v386 = vmul.f32 %v378, %v378
        %v387 = vmul.f32 %v379, %v379
        %v388 = vmul.f32 %v380, %v380
        %v389 = vmul.f32 %v381, %v381
        %390 = vadd.xlane.f32.xlu0 %v382
        %v391 = vpop.xlane.xlu0 %390
        %392 = vadd.xlane.f32.xlu0 %v383
        %v393 = vpop.xlane.xlu0 %392
        %394 = vadd.xlane.f32.xlu0 %v384
        %v395 = vpop.xlane.xlu0 %394
        %396 = vadd.xlane.f32.xlu0 %v385
        %v397 = vpop.xlane.xlu0 %396
        %398 = vadd.xlane.f32.xlu0 %v386
        %v399 = vpop.xlane.xlu0 %398
        %400 = vadd.xlane.f32.xlu0 %v387
        %v401 = vpop.xlane.xlu0 %400
        %402 = vadd.xlane.f32.xlu0 %v388
        %v403 = vpop.xlane.xlu0 %402
        %404 = vadd.xlane.f32.xlu0 %v389
        %v405 = vpop.xlane.xlu0 %404
        %v406 = vmul.f32 %v391, %v365
        %v407 = vmul.f32 %v393, %v365
        %v408 = vmul.f32 %v395, %v365
        %v409 = vmul.f32 %v397, %v365
        %v410 = vmul.f32 %v399, %v365
        %v411 = vmul.f32 %v401, %v365
        %v412 = vmul.f32 %v403, %v365
        %v413 = vmul.f32 %v405, %v365
        %v414 = vadd.f32 %v406, 1e-06
        %v415 = vadd.f32 %v407, 1e-06
        %v416 = vadd.f32 %v408, 1e-06
        %v417 = vadd.f32 %v409, 1e-06
        %v418 = vadd.f32 %v410, 1e-06
        %v419 = vadd.f32 %v411, 1e-06
        %v420 = vadd.f32 %v412, 1e-06
        %v421 = vadd.f32 %v413, 1e-06
        %v422 = vrsqrt.pop %v414
        %v423 = vrsqrt.pop %v415
        %v424 = vrsqrt.pop %v416
        %v425 = vrsqrt.pop %v417
        %v426 = vrsqrt.pop %v418
        %v427 = vrsqrt.pop %v419
        %v428 = vrsqrt.pop %v420
        %v429 = vrsqrt.pop %v421
        %v430 = vmul.f32 %v374, %v422
        %v431 = vmul.f32 %v375, %v423
        %v432 = vmul.f32 %v376, %v424
        %v433 = vmul.f32 %v377, %v425
        %v434 = vmul.f32 %v378, %v426
        %v435 = vmul.f32 %v379, %v427
        %v436 = vmul.f32 %v380, %v428
        %v437 = vmul.f32 %v381, %v429
        %v438 = vlaneseq
        %v439 = vshrl.u32 %v438, 7
        %v440 = vsub.s32 1, %v439
        %v441 = vrot.slane %v234, %v440
        %v442 = vmul.f32 %v430, %v441
        %v443 = vmul.f32 %v431, %v441
        %v444 = vmul.f32 %v432, %v441
        %v445 = vmul.f32 %v433, %v441
        %v446 = vmul.f32 %v434, %v441
        %v447 = vmul.f32 %v435, %v441
        %v448 = vmul.f32 %v436, %v441
        %v449 = vmul.f32 %v437, %v441
        %v450 = vlaneseq
        %v451 = vshrl.u32 %v450, 7
        %v452 = vsub.s32 2, %v451
        %v453 = vrot.slane %v234, %v452
        %v454 = vadd.f32 %v442, %v453
        %v455 = vadd.f32 %v443, %v453
        %v456 = vadd.f32 %v444, %v453
        %v457 = vadd.f32 %v445, %v453
        %v458 = vadd.f32 %v446, %v453
        %v459 = vadd.f32 %v447, %v453
        %v460 = vadd.f32 %v448, %v453
        %v461 = vadd.f32 %v449, %v453
        %v462 = vld [vmem:[%s218] sm:$0xf]
        %v463 = vld [vmem:[%s218 + $0x4] sm:$0xf]
        %v464 = vld [vmem:[%s218 + $0x8] sm:$0xf]
        %v465 = vld [vmem:[%s218 + $0xc] sm:$0xf]
        %v466 = vld [vmem:[%s218 + $0x10] sm:$0xf]
        %v467 = vld [vmem:[%s218 + $0x14] sm:$0xf]
        %v468 = vld [vmem:[%s218 + $0x18] sm:$0xf]
        %v469 = vld [vmem:[%s218 + $0x1c] sm:$0xf]
        %v470 = vunpack.c.l.bf16 %v462
        %v471 = vunpack.c.l.bf16 %v463
        %v472 = vunpack.c.l.bf16 %v464
        %v473 = vunpack.c.l.bf16 %v465
        %v474 = vunpack.c.l.bf16 %v466
        %v475 = vunpack.c.l.bf16 %v467
        %v476 = vunpack.c.l.bf16 %v468
        %v477 = vunpack.c.l.bf16 %v469
        %v478 = vadd.f32 %v454, %v470
        %v479 = vadd.f32 %v455, %v471
        %v480 = vadd.f32 %v456, %v472
        %v481 = vadd.f32 %v457, %v473
        %v482 = vadd.f32 %v458, %v474
        %v483 = vadd.f32 %v459, %v475
        %v484 = vadd.f32 %v460, %v476
        %v485 = vadd.f32 %v461, %v477
        %v486 = vpack.c.bf16 %v479, %v478
        %v487 = vpack.c.bf16 %v481, %v480
        %v488 = vpack.c.bf16 %v483, %v482
        %v489 = vpack.c.bf16 %v485, %v484
        %v494 = vunpack.c.l.b16 %v486
        %v495 = vunpack.c.h.b16 %v486
        %v496 = vunpack.c.l.b16 %v487
        %v497 = vunpack.c.h.b16 %v487
        %v498 = vunpack.c.l.b16 %v488
        %v499 = vunpack.c.h.b16 %v488
        %v500 = vunpack.c.l.b16 %v489
        %v501 = vunpack.c.h.b16 %v489
        %v502 = vpack.c.b16 %v494, %v494
        %v503 = vpack.c.b16 %v495, %v495
        %v504 = vpack.c.b16 %v496, %v496
        %v505 = vpack.c.b16 %v497, %v497
        %v506 = vpack.c.b16 %v498, %v498
        %v507 = vpack.c.b16 %v499, %v499
        %v508 = vpack.c.b16 %v500, %v500
        %v509 = vpack.c.b16 %v501, %v501
        %518 = vst [vmem:[%s207] sm:$0xf] %v502
        %519 = vst [vmem:[%s207 + $0x4] sm:$0xf] %v503
        %520 = vst [vmem:[%s207 + $0x8] sm:$0xf] %v504
        %521 = vst [vmem:[%s207 + $0xc] sm:$0xf] %v505
        %522 = vst [vmem:[%s207 + $0x10] sm:$0xf] %v506
        %523 = vst [vmem:[%s207 + $0x14] sm:$0xf] %v507
        %524 = vst [vmem:[%s207 + $0x18] sm:$0xf] %v508
        %525 = vst [vmem:[%s207 + $0x1c] sm:$0xf] %v509
        %s526 = sand.u32 %s120, 1
        %s527 = scalar_lea.sflag [#allocation3], %s526
        %s528 = sand.u32 %s120, 1
        %s529 = smul.addr %s528, 32
        %s530 = scalar_lea.vmem [#allocation2], %s529
        // Predicated region
        $region37: #{tpu_custom_call.1} parent=35 // pred_check
          %p531 = pneg %p130
        $region38: #{tpu_custom_call.1} parent=35 // pred_check_branch
          %533 = sbr.rel (%p531) target = $region40
        $region39: #{tpu_custom_call.1} parent=35 // pred_region
          %s534 = smul.u32 8, %s18
          %s536 = ssub.s32 512, 512
          %537 = vsyncadd %s527, %s536
          %s538 = smul.addr %s534, 64
          %s539 = scalar_lea.hbm %s4, %s538
          %s540 = sshll.u32 %s530, 4
          %s541 = int_to_ptr.vmem [resolvable:$true] %s540
          %546 = dma.vmem_to_hbm [thread:$0]  %s541, 512, %s539, %s527, 64, 64, 4
        $region40: #{tpu_custom_call.1} parent=35 // pred_fallthru
          _
      $region36: #{tpu_custom_call.1} parent=5 // pred_fallthru
        _
      %p547 = scmp.le.s32.totalorder 2, %s13
      // Predicated region
      $region41: #{tpu_custom_call.1} parent=5 // pred_check
        %p548 = pneg %p547
      $region42: #{tpu_custom_call.1} parent=5 // pred_check_branch
        %550 = sbr.rel (%p548) target = $region44
      $region43: #{tpu_custom_call.1} parent=5 // pred_region
        %s551 = ssub.s32 %s13, 2
        // Predicated region
        $region45: #{tpu_custom_call.1} parent=43 // pred_check
          %p552 = pneg %p136
        $region46: #{tpu_custom_call.1} parent=43 // pred_check_branch
          %554 = sbr.rel (%p552) target = $region48
        $region47: #{tpu_custom_call.1} parent=43 // pred_region
          %s555 = sand.u32 %s121, 1
          %s556 = scalar_lea.sflag [#allocation3], %s555
          %s557 = sand.u32 %s121, 1
          %s558 = smul.addr %s557, 32
          %s559 = scalar_lea.vmem [#allocation2], %s558
          %560 = dma.done %s556, 512
        $region48: #{tpu_custom_call.1} parent=43 // pred_fallthru
          _
      $region44: #{tpu_custom_call.1} parent=5 // pred_fallthru
        _
    $region6: #{tpu_custom_call.1} parent=1 // loop_footer
      %s17 = sadd.s32 1, %s13
    $region7: #{tpu_custom_call.1} parent=1 // loop_footer_branch
      %12 = sbr.rel target = $region3
    $region8: #{tpu_custom_call.1} parent=1 // loop_exit
      _
    %561 = vsyncpa [#allocation3], 1
    %s562 = scalar_lea.sflag [#allocation3], 1
    %563 = vsyncpa %s562, 1

</llo_original>
